<compile_context>
chip_gen: v5e
topology: v5e:2x2
jax: 0.10.0
libtpu: 0.0.40
codegen_flags: <defaults>
</compile_context>

<pallas_src>
import jax
import jax.numpy as jnp
from jax.experimental import pallas as pl
from jax.experimental.pallas import tpu as pltpu


# --------------------------------------------------------------------------- #
# Pallas kernel: cosine scores on the MXU + online (tiled) max / argmax.
# --------------------------------------------------------------------------- #
def _make_match_kernel(tk, tb, tb_pad):
    needs_col_mask = tb_pad != tb  # static: only emit the pad-column mask if needed

    def kernel(sthr_ref, a_ref, b_ref, max_ref, idx_ref, m_acc, i_acc):
        k = pl.program_id(2)

        @pl.when(k == 0)
        def _():
            m_acc[...] = jnp.full(m_acc.shape, -jnp.inf, m_acc.dtype)
            i_acc[...] = jnp.zeros(i_acc.shape, i_acc.dtype)

        # scores = a @ b^T on the MXU (bf16 inputs, f32 accumulation).
        # a_ref: (NB, TM, C), b_ref: (NB, TK, C) -> (NB, TM, TK)
        scores = jnp.einsum(
            "bik,bjk->bij", a_ref[...], b_ref[...],
            preferred_element_type=jnp.float32,
        )

        col = jax.lax.broadcasted_iota(jnp.int32, scores.shape, 2)
        if needs_col_mask:
            # Only the last Tb tile can contain pad columns (pad < TK).
            scores = jnp.where(col + k * tk < tb, scores, -jnp.inf)

        # Per-tile max + first-occurrence argmax, folded into the running
        # accumulator over the Tb grid axis (online argmax).
        tile_max = jnp.max(scores, axis=-1)                          # (NB, TM)
        tile_idx = jnp.min(
            jnp.where(scores == tile_max[..., None], col, jnp.int32(2 ** 30)),
            axis=-1,
        ) + k * tk                                                   # global column

        better = tile_max > m_acc[...]      # strict ">" keeps first occurrence
        i_acc[...] = jnp.where(better, tile_idx, i_acc[...])
        m_acc[...] = jnp.where(better, tile_max, m_acc[...])

        @pl.when(k == pl.num_programs(2) - 1)
        def _():
            # Threshold applied to the row max only (equivalent to masking the
            # full scores tile):  dist > thr  <=>  score < 1 - thr^2/2.
            m = m_acc[...]
            below = m < sthr_ref[0]
            max_ref[...] = jnp.where(below, -jnp.inf, m)
            idx_ref[...] = jnp.where(below, 0, i_acc[...])  # torch argmax of all--inf = 0

    return kernel


# --------------------------------------------------------------------------- #
# Tiling heuristics (8/128/256-aligned, VMEM-budget aware).
# --------------------------------------------------------------------------- #
def _round_up(x, m):
    return ((x + m - 1) // m) * m


def _vmem_capacity_bytes():
    try:
        return int(pltpu.get_tpu_info().vmem_capacity_bytes)
    except Exception:          # conservative fallback (v7x-sized VMEM)
        return 64 * 1024 * 1024


def _pick_row_tile(ta):
    """(tile, padded length) for the even-token (a) axis."""
    if ta <= 512:
        ta_pad = _round_up(ta, 8)        # single tile, 8-aligned sublanes
        return ta_pad, ta_pad
    ta_pad = _round_up(ta, 256)          # 256-aligned: fills MXU M dim, unmasked stores
    return 256, ta_pad


def _pick_col_tile(tb):
    """(tile, padded length) for the odd-token (b) axis."""
    if tb <= 1024:
        tb_pad = _round_up(tb, 128)      # single Tb step: b stays resident across Ta
        return tb_pad, tb_pad
    tb_pad = _round_up(tb, 256)
    return 256, tb_pad


def _pick_batch_tile(n, tm, tk, c, budget_bytes):
    """Largest divisor of n whose per-step footprint fits the VMEM budget."""
    work_cap = max(1, (1 << 22) // (tm * tk))        # keep the f32 scores block bounded
    best = 1
    for cand in range(1, n + 1):
        if n % cand:
            continue
        in_bytes = 2 * cand * (tm + tk) * c * 2      # double-buffered bf16 a/b tiles
        sc_bytes = cand * tm * tk * 4                # f32 scores intermediate
        out_bytes = cand * tm * (2 * 8 + 8)          # outs (double-buffered) + accumulators
        if cand <= work_cap and in_bytes + sc_bytes + out_bytes <= budget_bytes:
            best = cand
    return best


def _bipartite_match(a, b, score_thr):
    """a: (N, Ta, C) f32 unit rows, b: (N, Tb, C) f32 unit rows -> (N, Ta) max & idx."""
    n, ta, c = a.shape
    tb = b.shape[1]

    tm, ta_pad = _pick_row_tile(ta)
    tk, tb_pad = _pick_col_tile(tb)

    vmem_limit = min(int(0.75 * _vmem_capacity_bytes()), 96 * 1024 * 1024)
    nb = _pick_batch_tile(n, tm, tk, c, budget_bytes=vmem_limit // 2)

    # v7x has 2 TensorCores: expose >= 2 parallel units when it does not force an
    # unaligned (sub-8) batch block on the output writeback.
    if (n // nb) * (ta_pad // tm) < 2 and nb % 2 == 0 and (nb // 2) % 8 == 0:
        nb //= 2

    # Inputs are normalized already; cast to bf16 (halves DMA + resident b) and pad.
    a = a.astype(jnp.bfloat16)
    b = b.astype(jnp.bfloat16)
    if ta_pad != ta:
        a = jnp.pad(a, ((0, 0), (0, ta_pad - ta), (0, 0)))
    if tb_pad != tb:
        b = jnp.pad(b, ((0, 0), (0, tb_pad - tb), (0, 0)))

    grid = (n // nb, ta_pad // tm, tb_pad // tk)
    kernel = _make_match_kernel(tk=tk, tb=tb, tb_pad=tb_pad)

    node_max, node_idx = pl.pallas_call(
        kernel,
        out_shape=(
            jax.ShapeDtypeStruct((n, ta_pad), jnp.float32),
            jax.ShapeDtypeStruct((n, ta_pad), jnp.int32),
        ),
        grid=grid,
        in_specs=[
            pl.BlockSpec(memory_space=pltpu.MemorySpace.SMEM),          # score threshold
            pl.BlockSpec((nb, tm, c), lambda i, j, k: (i, j, 0)),       # a (even tokens)
            pl.BlockSpec((nb, tk, c), lambda i, j, k: (i, k, 0)),       # b (odd tokens)
        ],
        out_specs=(
            pl.BlockSpec((nb, tm), lambda i, j, k: (i, j)),
            pl.BlockSpec((nb, tm), lambda i, j, k: (i, j)),
        ),
        scratch_shapes=[
            pltpu.VMEM((nb, tm), jnp.float32),                          # running max
            pltpu.VMEM((nb, tm), jnp.int32),                            # running argmax
        ],
        compiler_params=pltpu.CompilerParams(
            dimension_semantics=("parallel", "parallel", "arbitrary"),
            vmem_limit_bytes=vmem_limit,
        ),
    )(score_thr, a, b)

    return node_max[:, :ta], node_idx[:, :ta]


# --------------------------------------------------------------------------- #
# Module forward.
# --------------------------------------------------------------------------- #
def _compute_distance_threshold(metric):
    """Mirrors the module's compute_distance_threshold."""
    length = metric.shape[0]
    if length < 2:
        return jnp.float32(0.5)
    idx = max(1, length // 16)
    # TODO(synk): torch's `.item()` on the (1, T, T) cdist only succeeds for T == 1;
    # we mirror element [0, 0, 0] (distance between metric[0,0,:] and metric[idx,0,:]).
    diff = metric[0, 0, :] - metric[idx, 0, :]
    return jnp.sqrt(jnp.sum(diff * diff))


def bipartite_soft_matching_with_distance(metric, r, is_upsample, distance_threshold=None):
    """Returns (merge, unmerge) closures, matching the PyTorch module's forward()."""
    n, t, c = metric.shape
    protected = 0
    r = min(r, (t - protected) // 2)

    if distance_threshold is None:
        distance_threshold = _compute_distance_threshold(metric)
    thr = jnp.asarray(distance_threshold, jnp.float32)
    # On unit-normalized tokens:  dist(a, b) > thr  <=>  cos(a, b) < 1 - thr^2 / 2.
    score_thr = (1.0 - 0.5 * thr * thr).reshape(1).astype(jnp.float32)

    # metric = metric / metric.norm(dim=-1, keepdim=True) — hoisted out of the kernel
    # so the Ta-resident b tile is normalized exactly once.
    # TODO(synk): eps guard differs from torch, which yields NaNs on zero-norm rows.
    metric_n = metric.astype(jnp.float32)
    metric_n = metric_n * jax.lax.rsqrt(
        jnp.sum(metric_n * metric_n, axis=-1, keepdims=True) + 1e-12)

    a = metric_n[:, ::2, :]                                    # (N, Ta, C)
    b = metric_n[:, 1::2, :]                                   # (N, Tb, C)
    tb = b.shape[1]

    node_max, node_idx = _bipartite_match(a, b, score_thr)     # (N, Ta) each

    # TODO(synk): the argsort / top-r split and the merge/unmerge gather-scatter
    # closures stay in plain JAX (data-dependent indexing over the full token
    # axis has no clean single-kernel Pallas expression here).
    edge_idx = jnp.argsort(-node_max, axis=-1)                 # descending
    unm_idx = edge_idx[:, r:]                                  # (N, Ta - r)
    src_idx = edge_idx[:, :r]                                  # (N, r)
    dst_idx = jnp.take_along_axis(node_idx, src_idx, axis=-1)  # (N, r)

    def merge(x, mode="mean"):
        src = x[:, ::2, :]
        dst = x[:, 1::2, :]
        nbt, t1, cx = src.shape
        unm = jnp.take_along_axis(
            src, jnp.broadcast_to(unm_idx[..., None], (nbt, t1 - r, cx)), axis=1)
        src_g = jnp.take_along_axis(
            src, jnp.broadcast_to(src_idx[..., None], (nbt, r, cx)), axis=1)

        # One-hot scatter: (N, r, Tb) @ (N, r, C) -> (N, Tb, C) on the MXU.
        onehot = (dst_idx[..., None] ==
                  jnp.arange(tb, dtype=dst_idx.dtype)[None, None, :]).astype(x.dtype)
        sums = jnp.einsum("nrt,nrc->ntc", onehot, src_g,
                          preferred_element_type=jnp.float32).astype(x.dtype)

        if is_upsample or mode == "sum":
            dst = dst + sums                                    # scatter_add
        else:
            counts = jnp.sum(onehot, axis=1)[..., None]         # (N, Tb, 1)
            dst = (dst + sums) / (1.0 + counts)                 # scatter_reduce 'mean'
        return jnp.concatenate([unm, dst], axis=1)

    def unmerge(x):
        unm_len = unm_idx.shape[1]
        unm = x[:, :unm_len, :]
        dst = x[:, unm_len:, :]
        nbt, _, cx = unm.shape
        src = jnp.take_along_axis(
            dst, jnp.broadcast_to(dst_idx[..., None], (nbt, r, cx)), axis=1)

        def build_one(u, d, s, ui, si):
            out = jnp.zeros((t, cx), dtype=x.dtype)
            out = out.at[1::2, :].set(d)
            out = out.at[2 * ui, :].set(u)
            out = out.at[2 * si, :].set(s)
            return out

        return jax.vmap(build_one)(unm, dst, src, unm_idx, src_idx)

    return merge, unmerge


if __name__ == "__main__":
    key = jax.random.PRNGKey(0)
    k1, k2 = jax.random.split(key)

    n, t, c = 2, 16, 32
    r = 4

    metric = jax.random.normal(k1, (n, t, c), dtype=jnp.float32)
    x = jax.random.normal(k2, (n, t, c), dtype=jnp.float32)

    merge, unmerge = bipartite_soft_matching_with_distance(
        metric, r=r, is_upsample=False, distance_threshold=1.3)

    merged = merge(x)            # (n, t - r, c)
    restored = unmerge(merged)   # (n, t, c)
    jax.block_until_ready((merged, restored))

    assert merged.shape == (n, t - r, c), merged.shape
    assert restored.shape == (n, t, c), restored.shape
    print("KERNEL_OK")
</pallas_src>

<mosaic_0001>
module attributes {stable_mosaic.version = 11 : i64} {
  func.func @kernel(%arg0: i32, %arg1: i32, %arg2: i32, %arg3: memref<1xf32, #tpu.memory_space<smem>>, %arg4: memref<2x8x32xbf16, #tpu.memory_space<vmem>>, %arg5: memref<2x128x32xbf16, #tpu.memory_space<vmem>>, %arg6: memref<2x8xf32, #tpu.memory_space<vmem>>, %arg7: memref<2x8xi32, #tpu.memory_space<vmem>>, %arg8: memref<2x8xf32, #tpu.memory_space<vmem>>, %arg9: memref<2x8xi32, #tpu.memory_space<vmem>>) attributes {dimension_semantics = [#tpu.dimension_semantics<parallel>, #tpu.dimension_semantics<parallel>, #tpu.dimension_semantics<arbitrary>], iteration_bounds = array<i64: 1, 1, 1>, scalar_prefetch = 0 : i64, scratch_operands = 2 : i64, tpu.core_type = #tpu.core_type<tc>, window_params = [{transform_indices = @transform_0, window_bounds = array<i64: 1>}, {transform_indices = @transform_1, window_bounds = array<i64: 2, 8, 32>}, {transform_indices = @transform_2, window_bounds = array<i64: 2, 128, 32>}, {transform_indices = @transform_3, window_bounds = array<i64: 2, 8>}, {transform_indices = @transform_4, window_bounds = array<i64: 2, 8>}]} {
    %c0_i32 = arith.constant 0 : i32
    %0 = arith.cmpi eq, %arg2, %c0_i32 : i32
    %1 = arith.extui %0 : i1 to i32
    %c0_i32_0 = arith.constant 0 : i32
    %2 = arith.cmpi ne, %1, %c0_i32_0 : i32
    scf.if %2 {
      %cst_22 = arith.constant 0xFF800000 : f32
      %35 = vector.broadcast %cst_22 : f32 to vector<2x8xf32>
      %c0_23 = arith.constant 0 : index
      %c0_24 = arith.constant 0 : index
      %36 = vector.load %arg8[%c0_23, %c0_24] : memref<2x8xf32, #tpu.memory_space<vmem>>, vector<2x8xf32>
      tpu.vector_store %arg8[%c0_23, %c0_24], %35 {strides = array<i32>} : memref<2x8xf32, #tpu.memory_space<vmem>>, vector<2x8xf32>,
      %c0_i32_25 = arith.constant 0 : i32
      %37 = vector.broadcast %c0_i32_25 : i32 to vector<2x8xi32>
      %c0_26 = arith.constant 0 : index
      %c0_27 = arith.constant 0 : index
      %38 = vector.load %arg9[%c0_26, %c0_27] : memref<2x8xi32, #tpu.memory_space<vmem>>, vector<2x8xi32>
      tpu.vector_store %arg9[%c0_26, %c0_27], %37 {strides = array<i32>} : memref<2x8xi32, #tpu.memory_space<vmem>>, vector<2x8xi32>,
    } else {
    }
    %c0 = arith.constant 0 : index
    %c0_1 = arith.constant 0 : index
    %c0_2 = arith.constant 0 : index
    %3 = vector.load %arg4[%c0, %c0_1, %c0_2] : memref<2x8x32xbf16, #tpu.memory_space<vmem>>, vector<2x8x32xbf16>
    %c0_3 = arith.constant 0 : index
    %c0_4 = arith.constant 0 : index
    %c0_5 = arith.constant 0 : index
    %4 = vector.load %arg5[%c0_3, %c0_4, %c0_5] : memref<2x128x32xbf16, #tpu.memory_space<vmem>>, vector<2x128x32xbf16>
    "tpu.trace_start"() <{level = 10 : i32, message = "bik,bjk->bij"}> : () -> ()
    %cst = arith.constant dense<0.000000e+00> : vector<2x8x128xf32>
    %5 = tpu.matmul %3, %4, %cst {dimension_numbers = #tpu.dot_dimension_numbers<[2], [2], [1], [1], [0, 0, 0, 1, 1, 1], [0], [0]>} : vector<2x8x32xbf16>, vector<2x128x32xbf16>, vector<2x8x128xf32> -> vector<2x8x128xf32>
    "tpu.trace_stop"() : () -> ()
    %6 = tpu.iota {dimensions = array<i32: 2>} : vector<2x8x128xi32>
    %c128_i32 = arith.constant 128 : i32
    %7 = arith.muli %arg2, %c128_i32 : i32
    %8 = vector.broadcast %7 : i32 to vector<2x8x128xi32>
    %9 = arith.addi %6, %8 : vector<2x8x128xi32>
    %c8_i32 = arith.constant 8 : i32
    %10 = vector.broadcast %c8_i32 : i32 to vector<2x8x128xi32>
    %11 = arith.cmpi slt, %9, %10 : vector<2x8x128xi32>
    %cst_6 = arith.constant 0xFF800000 : f32
    %12 = vector.broadcast %cst_6 : f32 to vector<2x8x128xf32>
    %13 = arith.select %11, %5, %12 : vector<2x8x128xi1>, vector<2x8x128xf32>
    %cst_7 = arith.constant dense<0xFF800000> : vector<2x8xf32>
    %14 = vector.multi_reduction <maximumf>, %13, %cst_7 [2] : vector<2x8x128xf32> to vector<2x8xf32>
    %15 = vector.shape_cast %14 : vector<2x8xf32> to vector<2x8x1xf32>
    %16 = vector.broadcast %15 : vector<2x8x1xf32> to vector<2x8x128xf32>
    %17 = arith.cmpf oeq, %13, %16 : vector<2x8x128xf32>
    %c1073741824_i32 = arith.constant 1073741824 : i32
    %18 = vector.broadcast %c1073741824_i32 : i32 to vector<2x8x128xi32>
    %19 = arith.select %17, %6, %18 : vector<2x8x128xi1>, vector<2x8x128xi32>
    %cst_8 = arith.constant dense<2147483647> : vector<2x8xi32>
    %20 = vector.multi_reduction <minsi>, %19, %cst_8 [2] : vector<2x8x128xi32> to vector<2x8xi32>
    %c128_i32_9 = arith.constant 128 : i32
    %21 = arith.muli %arg2, %c128_i32_9 : i32
    %22 = vector.broadcast %21 : i32 to vector<2x8xi32>
    %23 = arith.addi %20, %22 : vector<2x8xi32>
    %c0_10 = arith.constant 0 : index
    %c0_11 = arith.constant 0 : index
    %24 = vector.load %arg8[%c0_10, %c0_11] : memref<2x8xf32, #tpu.memory_space<vmem>>, vector<2x8xf32>
    %25 = arith.cmpf ogt, %14, %24 : vector<2x8xf32>
    %c0_12 = arith.constant 0 : index
    %c0_13 = arith.constant 0 : index
    %26 = vector.load %arg9[%c0_12, %c0_13] : memref<2x8xi32, #tpu.memory_space<vmem>>, vector<2x8xi32>
    %27 = arith.select %25, %23, %26 : vector<2x8xi1>, vector<2x8xi32>
    %c0_14 = arith.constant 0 : index
    %c0_15 = arith.constant 0 : index
    %28 = vector.load %arg9[%c0_14, %c0_15] : memref<2x8xi32, #tpu.memory_space<vmem>>, vector<2x8xi32>
    tpu.vector_store %arg9[%c0_14, %c0_15], %27 {strides = array<i32>} : memref<2x8xi32, #tpu.memory_space<vmem>>, vector<2x8xi32>,
    %c0_16 = arith.constant 0 : index
    %c0_17 = arith.constant 0 : index
    %29 = vector.load %arg8[%c0_16, %c0_17] : memref<2x8xf32, #tpu.memory_space<vmem>>, vector<2x8xf32>
    %30 = arith.select %25, %14, %29 : vector<2x8xi1>, vector<2x8xf32>
    %c0_18 = arith.constant 0 : index
    %c0_19 = arith.constant 0 : index
    %31 = vector.load %arg8[%c0_18, %c0_19] : memref<2x8xf32, #tpu.memory_space<vmem>>, vector<2x8xf32>
    tpu.vector_store %arg8[%c0_18, %c0_19], %30 {strides = array<i32>} : memref<2x8xf32, #tpu.memory_space<vmem>>, vector<2x8xf32>,
    %c0_i32_20 = arith.constant 0 : i32
    %32 = arith.cmpi eq, %arg2, %c0_i32_20 : i32
    %33 = arith.extui %32 : i1 to i32
    %c0_i32_21 = arith.constant 0 : i32
    %34 = arith.cmpi ne, %33, %c0_i32_21 : i32
    scf.if %34 {
      %c0_22 = arith.constant 0 : index
      %c0_23 = arith.constant 0 : index
      %35 = vector.load %arg8[%c0_22, %c0_23] : memref<2x8xf32, #tpu.memory_space<vmem>>, vector<2x8xf32>
      %c0_24 = arith.constant 0 : index
      %36 = memref.load %arg3[%c0_24] : memref<1xf32, #tpu.memory_space<smem>>
      %37 = vector.broadcast %36 : f32 to vector<2x8xf32>
      %38 = arith.cmpf olt, %35, %37 : vector<2x8xf32>
      %cst_25 = arith.constant 0xFF800000 : f32
      %39 = vector.broadcast %cst_25 : f32 to vector<2x8xf32>
      %40 = arith.select %38, %39, %35 : vector<2x8xi1>, vector<2x8xf32>
      %c0_26 = arith.constant 0 : index
      %c0_27 = arith.constant 0 : index
      %41 = vector.load %arg6[%c0_26, %c0_27] : memref<2x8xf32, #tpu.memory_space<vmem>>, vector<2x8xf32>
      tpu.vector_store %arg6[%c0_26, %c0_27], %40 {strides = array<i32>} : memref<2x8xf32, #tpu.memory_space<vmem>>, vector<2x8xf32>,
      %c0_28 = arith.constant 0 : index
      %c0_29 = arith.constant 0 : index
      %42 = vector.load %arg9[%c0_28, %c0_29] : memref<2x8xi32, #tpu.memory_space<vmem>>, vector<2x8xi32>
      %c0_i32_30 = arith.constant 0 : i32
      %43 = vector.broadcast %c0_i32_30 : i32 to vector<2x8xi32>
      %44 = arith.select %38, %43, %42 : vector<2x8xi1>, vector<2x8xi32>
      %c0_31 = arith.constant 0 : index
      %c0_32 = arith.constant 0 : index
      %45 = vector.load %arg7[%c0_31, %c0_32] : memref<2x8xi32, #tpu.memory_space<vmem>>, vector<2x8xi32>
      tpu.vector_store %arg7[%c0_31, %c0_32], %44 {strides = array<i32>} : memref<2x8xi32, #tpu.memory_space<vmem>>, vector<2x8xi32>,
    } else {
    }
    return
  }
  func.func @transform_0(%arg0: i32, %arg1: i32, %arg2: i32) -> i32 {
    %c0_i32 = arith.constant 0 : i32
    %c0_i32_0 = arith.constant 0 : i32
    return %c0_i32 : i32
  }
  func.func @transform_1(%arg0: i32, %arg1: i32, %arg2: i32) -> (i32, i32, i32) {
    %c0_i32 = arith.constant 0 : i32
    %c0_i32_0 = arith.constant 0 : i32
    return %arg0, %arg1, %c0_i32 : i32, i32, i32
  }
  func.func @transform_2(%arg0: i32, %arg1: i32, %arg2: i32) -> (i32, i32, i32) {
    %c0_i32 = arith.constant 0 : i32
    %c0_i32_0 = arith.constant 0 : i32
    return %arg0, %arg2, %c0_i32 : i32, i32, i32
  }
  func.func @transform_3(%arg0: i32, %arg1: i32, %arg2: i32) -> (i32, i32) {
    %c0_i32 = arith.constant 0 : i32
    return %arg0, %arg1 : i32, i32
  }
  func.func @transform_4(%arg0: i32, %arg1: i32, %arg2: i32) -> (i32, i32) {
    %c0_i32 = arith.constant 0 : i32
    return %arg0, %arg1 : i32, i32
  }
}

</mosaic_0001>

<llo_original>
// kernel: tpu_custom_call.1
$region0: #{tpu_custom_call.1}
  #allocation0 [shape = 'u32[]', space=smem, size = 0x4, offset = 0x4, fixed_abs, tag = 'smem constant byte address 0x4 - core index']
  #allocation1 [shape = 'u32[72,128]{1,0:T(1,128)}', space=vmem, size = 0x9000, scoped, tag = 'internal scratch']
  #allocation2 [shape = 'f32[2,8]{1,0:T(2,128)}', space=vmem, size = 0x400, scoped, tag = 'scratch operand']
  #allocation3 [shape = 's32[2,8]{1,0:T(2,128)}', space=vmem, size = 0x400, scoped, tag = 'scratch operand']
  #allocation4 [shape = 'f32[1]{0:T(128)S(6)}', space=smem, size = 0x200, scoped, tag = 'scoped memory for tpu_custom_call.1']
  %s0 = inlined_call_operand.<no memory space> [shape: f32[1], index: 0, kind: input, shape index: {}]
  %s1 = inlined_call_operand.vmem [shape: bf16[2,8,32], index: 1, kind: input, shape index: {}]
  %s2 = inlined_call_operand.vmem [shape: bf16[2,128,32], index: 2, kind: input, shape index: {}]
  %s3 = inlined_call_operand.hbm [shape: f32[2,8], index: 3, kind: output, shape index: {0}]
  %s4 = inlined_call_operand.hbm [shape: s32[2,8], index: 4, kind: output, shape index: {1}]
  %5 = xla_tuple %s3, %s4
  %s6 = sld [smem:[#allocation0]]
  $region38: #{tpu_custom_call.1} parent=0
    _
  %s8 = ssub.s32 1, %s6
  %s9 = scalar_select 0, %s8, %s6
  %10 = sst [smem:[#allocation4]] %s0
  $region1: #{tpu_custom_call.1} parent=0
    #allocation5 [shape = 'u8[1024]{0}', space=vmem, size = 0x400, scoped, tag = 'output window, operand 0, single buffered']
    #allocation6 [shape = 's32[1]{0}', space=sflag, size = 0x4, scoped, tag = 'scoped memory for tpu_custom_call.1']
    #allocation7 [shape = 'u8[1024]{0}', space=vmem, size = 0x400, scoped, tag = 'output window, operand 1, single buffered']
    #allocation8 [shape = 's32[1]{0}', space=sflag, size = 0x4, scoped, tag = 'scoped memory for tpu_custom_call.1']
    %11 = vsyncpa [#allocation6], 0
    %12 = vsyncpa [#allocation8], 0
    // Predicated region
    $region2: #{tpu_custom_call.1} parent=1 // pred_check
      _
    $region3: #{tpu_custom_call.1} parent=1 // pred_check_branch
      %14 = sbr.rel (0) target = $region5
    $region4: #{tpu_custom_call.1} parent=1 // pred_region
      _
    $region5: #{tpu_custom_call.1} parent=1 // pred_fallthru
      _
    // Predicated region
    $region6: #{tpu_custom_call.1} parent=1 // pred_check
      _
    $region7: #{tpu_custom_call.1} parent=1 // pred_check_branch
      %16 = sbr.rel (0) target = $region9
    $region8: #{tpu_custom_call.1} parent=1 // pred_region
      _
    $region9: #{tpu_custom_call.1} parent=1 // pred_fallthru
      _
    // Predicated region
    $region10: #{tpu_custom_call.1} parent=1 // pred_check
      _
    $region11: #{tpu_custom_call.1} parent=1 // pred_check_branch
      %18 = sbr.rel (0) target = $region13
    $region12: #{tpu_custom_call.1} parent=1 // pred_region
      _
    $region13: #{tpu_custom_call.1} parent=1 // pred_fallthru
      _
    %p19 = scmp.eq.s32.totalorder 0, 0
    // Predicated region
    $region14: #{tpu_custom_call.1} parent=1 // pred_check
      %p20 = pneg %p19
    $region15: #{tpu_custom_call.1} parent=1 // pred_check_branch
      %22 = sbr.rel (%p20) target = $region17
    $region16: #{tpu_custom_call.1} parent=1 // pred_region
      %vm23 = vcmask 58368
      %24 = vst.msk [vmem:[#allocation2] sm:$0x3] %vm23, -inf
      %25 = vst.msk [vmem:[#allocation3] sm:$0x3] %vm23, 0
    $region17: #{tpu_custom_call.1} parent=1 // pred_fallthru
      _
    %v26 = vld [vmem:[%s1] sm:$0xf]
    %v27 = vld [vmem:[%s1 + $0x4] sm:$0xf]
    %v28 = vld [vmem:[%s2] sm:$0xf]
    %v29 = vld [vmem:[%s2 + $0x4] sm:$0xf]
    %v30 = vld [vmem:[%s2 + $0x8] sm:$0xf]
    %v31 = vld [vmem:[%s2 + $0xc] sm:$0xf]
    %v32 = vld [vmem:[%s2 + $0x10] sm:$0xf]
    %v33 = vld [vmem:[%s2 + $0x14] sm:$0xf]
    %v34 = vld [vmem:[%s2 + $0x18] sm:$0xf]
    %v35 = vld [vmem:[%s2 + $0x1c] sm:$0xf]
    %v36 = vld [vmem:[%s2 + $0x20] sm:$0xf]
    %v37 = vld [vmem:[%s2 + $0x24] sm:$0xf]
    %v38 = vld [vmem:[%s2 + $0x28] sm:$0xf]
    %v39 = vld [vmem:[%s2 + $0x2c] sm:$0xf]
    %v40 = vld [vmem:[%s2 + $0x30] sm:$0xf]
    %v41 = vld [vmem:[%s2 + $0x34] sm:$0xf]
    %v42 = vld [vmem:[%s2 + $0x38] sm:$0xf]
    %v43 = vld [vmem:[%s2 + $0x3c] sm:$0xf]
    %v44 = vld [vmem:[%s2 + $0x40] sm:$0xf]
    %v45 = vld [vmem:[%s2 + $0x44] sm:$0xf]
    %v46 = vld [vmem:[%s2 + $0x48] sm:$0xf]
    %v47 = vld [vmem:[%s2 + $0x4c] sm:$0xf]
    %v48 = vld [vmem:[%s2 + $0x50] sm:$0xf]
    %v49 = vld [vmem:[%s2 + $0x54] sm:$0xf]
    %v50 = vld [vmem:[%s2 + $0x58] sm:$0xf]
    %v51 = vld [vmem:[%s2 + $0x5c] sm:$0xf]
    %v52 = vld [vmem:[%s2 + $0x60] sm:$0xf]
    %v53 = vld [vmem:[%s2 + $0x64] sm:$0xf]
    %v54 = vld [vmem:[%s2 + $0x68] sm:$0xf]
    %v55 = vld [vmem:[%s2 + $0x6c] sm:$0xf]
    %v56 = vld [vmem:[%s2 + $0x70] sm:$0xf]
    %v57 = vld [vmem:[%s2 + $0x74] sm:$0xf]
    %v58 = vld [vmem:[%s2 + $0x78] sm:$0xf]
    %v59 = vld [vmem:[%s2 + $0x7c] sm:$0xf]
    %v76 = vunpack.c.l.b16 %v28
    %v77 = vunpack.c.l.b16 %v29
    %v78 = vunpack.c.l.b16 %v30
    %v79 = vunpack.c.l.b16 %v31
    %v80 = vunpack.c.l.b16 %v32
    %v81 = vunpack.c.l.b16 %v33
    %v82 = vunpack.c.l.b16 %v34
    %v83 = vunpack.c.l.b16 %v35
    %v84 = vunpack.c.l.b16 %v36
    %v85 = vunpack.c.l.b16 %v37
    %v86 = vunpack.c.l.b16 %v38
    %v87 = vunpack.c.l.b16 %v39
    %v88 = vunpack.c.l.b16 %v40
    %v89 = vunpack.c.l.b16 %v41
    %v90 = vunpack.c.l.b16 %v42
    %v91 = vunpack.c.l.b16 %v43
    %v92 = vpack.c.b16 %v77, %v76
    %v93 = vpack.c.b16 %v79, %v78
    %v94 = vpack.c.b16 %v81, %v80
    %v95 = vpack.c.b16 %v83, %v82
    %v96 = vpack.c.b16 %v85, %v84
    %v97 = vpack.c.b16 %v87, %v86
    %v98 = vpack.c.b16 %v89, %v88
    %v99 = vpack.c.b16 %v91, %v90
    %vm100 = vcmask 261120
    %v102 = vsel %vm100, %v26, 0
    %v105 = vsel %vm100, %v92, 0
    %v108 = vsel %vm100, %v93, 0
    %v111 = vsel %vm100, %v94, 0
    %v114 = vsel %vm100, %v95, 0
    %v117 = vsel %vm100, %v96, 0
    %v120 = vsel %vm100, %v97, 0
    %v123 = vsel %vm100, %v98, 0
    %v126 = vsel %vm100, %v99, 0
    %128 = vmatpush.bf16.xpose.msra.mxu0 %v126
    %129 = vmatpush.bf16.xpose.msra.mxu0 %v123
    %130 = vmatpush.bf16.xpose.msra.mxu0 %v120
    %131 = vmatpush.bf16.xpose.msra.mxu0 %v117
    %132 = vmatpush.bf16.xpose.msra.mxu0 %v114
    %133 = vmatpush.bf16.xpose.msra.mxu0 %v111
    %134 = vmatpush.bf16.xpose.msra.mxu0 %v108
    %135 = vmatpush.bf16.xpose.msra.mxu0 %v105
    %136 = vmatmul.bf16.gmra.mxu0 %v102
    %v137 = vpop.f32.mrf.mxu0
    %v138 = vadd.f32 0.0, %v137
    %v139 = vpop.f32.mrf.mxu0
    %140 = vdwg.mxu0
    %v157 = vunpack.c.l.b16 %v44
    %v158 = vunpack.c.l.b16 %v45
    %v159 = vunpack.c.l.b16 %v46
    %v160 = vunpack.c.l.b16 %v47
    %v161 = vunpack.c.l.b16 %v48
    %v162 = vunpack.c.l.b16 %v49
    %v163 = vunpack.c.l.b16 %v50
    %v164 = vunpack.c.l.b16 %v51
    %v165 = vunpack.c.l.b16 %v52
    %v166 = vunpack.c.l.b16 %v53
    %v167 = vunpack.c.l.b16 %v54
    %v168 = vunpack.c.l.b16 %v55
    %v169 = vunpack.c.l.b16 %v56
    %v170 = vunpack.c.l.b16 %v57
    %v171 = vunpack.c.l.b16 %v58
    %v172 = vunpack.c.l.b16 %v59
    %v173 = vpack.c.b16 %v158, %v157
    %v174 = vpack.c.b16 %v160, %v159
    %v175 = vpack.c.b16 %v162, %v161
    %v176 = vpack.c.b16 %v164, %v163
    %v177 = vpack.c.b16 %v166, %v165
    %v178 = vpack.c.b16 %v168, %v167
    %v179 = vpack.c.b16 %v170, %v169
    %v180 = vpack.c.b16 %v172, %v171
    %v182 = vsel %vm100, %v27, 0
    %v185 = vsel %vm100, %v173, 0
    %v188 = vsel %vm100, %v174, 0
    %v191 = vsel %vm100, %v175, 0
    %v194 = vsel %vm100, %v176, 0
    %v197 = vsel %vm100, %v177, 0
    %v200 = vsel %vm100, %v178, 0
    %v203 = vsel %vm100, %v179, 0
    %v206 = vsel %vm100, %v180, 0
    %208 = vmatpush.bf16.xpose.msra.mxu0 %v206
    %209 = vmatpush.bf16.xpose.msra.mxu0 %v203
    %210 = vmatpush.bf16.xpose.msra.mxu0 %v200
    %211 = vmatpush.bf16.xpose.msra.mxu0 %v197
    %212 = vmatpush.bf16.xpose.msra.mxu0 %v194
    %213 = vmatpush.bf16.xpose.msra.mxu0 %v191
    %214 = vmatpush.bf16.xpose.msra.mxu0 %v188
    %215 = vmatpush.bf16.xpose.msra.mxu0 %v185
    %216 = vmatmul.bf16.gmra.mxu0 %v182
    %v217 = vpop.f32.mrf.mxu0
    %v218 = vadd.f32 0.0, %v217
    %v219 = vpop.f32.mrf.mxu0
    %220 = vdwg.mxu0
    %v221 = vlaneseq
    %v222 = vand.u32 %v221, 127
    %s223 = smul.u32 0, 128
    %v224 = vstv %s223
    %v225 = vadd.s32 %v222, %v224
    %vm226 = vcmp.lt.s32.totalorder %v225, 8
    %v227 = vsel %vm226, %v138, -inf
    %v228 = vsel %vm226, %v218, -inf
    %229 = vmax.xlane.f32.xlu0 %v227
    %v230 = vpop.xlane.xlu0 %229
    %231 = vmax.xlane.f32.xlu0 %v228
    %v232 = vpop.xlane.xlu0 %231
    %vm233 = vcmp.eq.f32.partialorder %v227, %v230
    %vm234 = vcmp.eq.f32.partialorder %v228, %v232
    %v235 = vsel %vm233, %v222, 1073741824
    %v236 = vsel %vm234, %v222, 1073741824
    %v237 = vand.u32 %v235, 65535
    %v238 = vshra.s32 %v235, 16
    %v239 = vcvt.s32.f32 %v237
    %v240 = vcvt.s32.f32 %v238
    %241 = vmin.xlane.f32.xlu0 %v240
    %v242 = vpop.xlane.xlu0 %241
    %vm243 = vcmp.eq.f32.partialorder %v240, %v242
    %v244 = vsel %vm243, %v239, inf
    %245 = vmin.xlane.f32.xlu0 %v244
    %v246 = vpop.xlane.xlu0 %245
    %v247 = vcvt.f32.s32 %v246
    %v248 = vcvt.f32.s32 %v242
    %v249 = vshll.u32 %v248, 16
    %v250 = vadd.s32 %v249, %v247
    %v251 = vand.u32 %v236, 65535
    %v252 = vshra.s32 %v236, 16
    %v253 = vcvt.s32.f32 %v251
    %v254 = vcvt.s32.f32 %v252
    %255 = vmin.xlane.f32.xlu0 %v254
    %v256 = vpop.xlane.xlu0 %255
    %vm257 = vcmp.eq.f32.partialorder %v254, %v256
    %v258 = vsel %vm257, %v253, inf
    %259 = vmin.xlane.f32.xlu0 %v258
    %v260 = vpop.xlane.xlu0 %259
    %v261 = vcvt.f32.s32 %v260
    %v262 = vcvt.f32.s32 %v256
    %v263 = vshll.u32 %v262, 16
    %v264 = vadd.s32 %v263, %v261
    %v265 = vadd.s32 %v250, %v224
    %v266 = vadd.s32 %v264, %v224
    %v267 = vld [vmem:[#allocation2] sm:$0x3]
    %v269 = vperm.slane %v267, 0
    %v270 = vlaneseq
    %v271 = vshrl.u32 %v270, 7
    %273 = vset.pattern.permute.xlu0 %v271
    %274 = vperm.xlu0 %273, %v269
    %v275 = vpop.permute.xlu0 %274
    %v276 = vperm.slane %v267, 1
    %v277 = vlaneseq
    %v278 = vshrl.u32 %v277, 7
    %280 = vset.pattern.permute.xlu0 %v278
    %281 = vperm.xlu0 %280, %v276
    %v282 = vpop.permute.xlu0 %281
    %vm285 = vcmp.gt.f32.partialorder %v230, %v275
    %vm286 = vcmp.gt.f32.partialorder %v232, %v282
    %v287 = vld [vmem:[#allocation3] sm:$0x3]
    %v288 = vperm.slane %v287, 0
    %v289 = vlaneseq
    %v290 = vshrl.u32 %v289, 7
    %292 = vset.pattern.permute.xlu0 %v290
    %293 = vperm.xlu0 %292, %v288
    %v294 = vpop.permute.xlu0 %293
    %v295 = vperm.slane %v287, 1
    %v296 = vlaneseq
    %v297 = vshrl.u32 %v296, 7
    %299 = vset.pattern.permute.xlu0 %v297
    %300 = vperm.xlu0 %299, %v295
    %v301 = vpop.permute.xlu0 %300
    %v302 = vsel %vm285, %v265, %v294
    %v303 = vsel %vm286, %v266, %v301
    %304 = vset.pattern.permute.xlu0 0
    %305 = vperm.xlu0 %304, %v302
    %v306 = vpop.permute.xlu0 %305
    %307 = vset.pattern.permute.xlu0 0
    %308 = vperm.xlu0 %307, %v303
    %v309 = vpop.permute.xlu0 %308
    %v310 = vperm.slane %v306, %v222
    %v311 = vperm.slane %v309, %v222
    %vm312 = vcmask 1041409
    %v313 = vsel %vm312, %v311, %v310
    %vm314 = vcmask 58368
    %315 = vst.msk [vmem:[#allocation3] sm:$0x3] %vm314, %v313
    %v316 = vld [vmem:[#allocation2] sm:$0x3]
    %v318 = vperm.slane %v316, 0
    %v319 = vlaneseq
    %v320 = vshrl.u32 %v319, 7
    %322 = vset.pattern.permute.xlu0 %v320
    %323 = vperm.xlu0 %322, %v318
    %v324 = vpop.permute.xlu0 %323
    %v325 = vperm.slane %v316, 1
    %v326 = vlaneseq
    %v327 = vshrl.u32 %v326, 7
    %329 = vset.pattern.permute.xlu0 %v327
    %330 = vperm.xlu0 %329, %v325
    %v331 = vpop.permute.xlu0 %330
    %v334 = vsel %vm285, %v230, %v324
    %v335 = vsel %vm286, %v232, %v331
    %338 = vset.pattern.permute.xlu0 0
    %339 = vperm.xlu0 %338, %v334
    %v340 = vpop.permute.xlu0 %339
    %341 = vset.pattern.permute.xlu0 0
    %342 = vperm.xlu0 %341, %v335
    %v343 = vpop.permute.xlu0 %342
    %v344 = vperm.slane %v340, %v222
    %v345 = vperm.slane %v343, %v222
    %v346 = vsel %vm312, %v345, %v344
    %348 = vst.msk [vmem:[#allocation2] sm:$0x3] %vm314, %v346
    // Predicated region
    $region18: #{tpu_custom_call.1} parent=1 // pred_check
      %p349 = pneg %p19
    $region19: #{tpu_custom_call.1} parent=1 // pred_check_branch
      %351 = sbr.rel (%p349) target = $region21
    $region20: #{tpu_custom_call.1} parent=1 // pred_region
      %v352 = vld [vmem:[#allocation2] sm:$0x3]
      %s353 = sld [smem:[#allocation4]]
      %v354 = vstv %s353
      %vm355 = vcmp.lt.f32.partialorder %v352, %v354
      %v356 = vsel %vm355, -inf, %v352
      %357 = vst.msk [vmem:[#allocation5] sm:$0x3] %vm314, %v356
      %v358 = vld [vmem:[#allocation3] sm:$0x3]
      %v359 = vsel %vm355, 0, %v358
      %360 = vst.msk [vmem:[#allocation7] sm:$0x3] %vm314, %v359
    $region21: #{tpu_custom_call.1} parent=1 // pred_fallthru
      _
    // Predicated region
    $region22: #{tpu_custom_call.1} parent=1 // pred_check
      _
    $region23: #{tpu_custom_call.1} parent=1 // pred_check_branch
      %362 = sbr.rel (0) target = $region25
    $region24: #{tpu_custom_call.1} parent=1 // pred_region
      %364 = vsyncadd [#allocation6], 0
      %s366 = sshll.u32 [#allocation5], 4
      %s367 = int_to_ptr.vmem [resolvable:$true] %s366
      %s368 = sshll.u32 %s3, 4
      %s369 = int_to_ptr.hbm [resolvable:$true] %s368
      %371 = dma.vmem_to_hbm [thread:$0]  %s367, 32, %s369, [#allocation6]
    $region25: #{tpu_custom_call.1} parent=1 // pred_fallthru
      _
    // Predicated region
    $region26: #{tpu_custom_call.1} parent=1 // pred_check
      _
    $region27: #{tpu_custom_call.1} parent=1 // pred_check_branch
      %373 = sbr.rel (0) target = $region29
    $region28: #{tpu_custom_call.1} parent=1 // pred_region
      %375 = vsyncadd [#allocation8], 0
      %s377 = sshll.u32 [#allocation7], 4
      %s378 = int_to_ptr.vmem [resolvable:$true] %s377
      %s379 = sshll.u32 %s4, 4
      %s380 = int_to_ptr.hbm [resolvable:$true] %s379
      %382 = dma.vmem_to_hbm [thread:$0]  %s378, 32, %s380, [#allocation8]
    $region29: #{tpu_custom_call.1} parent=1 // pred_fallthru
      _
    // Predicated region
    $region30: #{tpu_custom_call.1} parent=1 // pred_check
      _
    $region31: #{tpu_custom_call.1} parent=1 // pred_check_branch
      %384 = sbr.rel (0) target = $region33
    $region32: #{tpu_custom_call.1} parent=1 // pred_region
      %386 = dma.done [#allocation6], 32
    $region33: #{tpu_custom_call.1} parent=1 // pred_fallthru
      _
    // Predicated region
    $region34: #{tpu_custom_call.1} parent=1 // pred_check
      _
    $region35: #{tpu_custom_call.1} parent=1 // pred_check_branch
      %388 = sbr.rel (0) target = $region37
    $region36: #{tpu_custom_call.1} parent=1 // pred_region
      %390 = dma.done [#allocation8], 32
    $region37: #{tpu_custom_call.1} parent=1 // pred_fallthru
      _
    %391 = vsyncpa [#allocation6], 1
    %392 = vsyncpa [#allocation8], 1

</llo_original>
